<compile_context>
chip_gen: v6e
topology: v6e:2x2x1
jax: 0.10.0
libtpu: 0.0.40
codegen_flags: <defaults>
</compile_context>

<pallas_src>
import functools

import jax
import jax.numpy as jnp
import numpy as np
from jax.experimental import pallas as pl
from jax.experimental.pallas import tpu as pltpu


def _divide_points(extent, parts):
    # Same ragged partition as the PyTorch module: int(extent / parts * i).
    return [int(extent / parts * i) for i in range(parts)] + [extent]


def _vmem_capacity_bytes():
    try:
        info = pltpu.get_tpu_info()
        cap = getattr(info, "vmem_capacity_bytes", None)
        if cap:
            return int(cap)
    except Exception:
        pass
    return 64 * 1024 * 1024  # v7x per-core capacity: safe lower bound everywhere


def _pick_time_block(t1, img_frame_bytes, res_frame_bytes, budget_bytes):
    """Largest divisor of t1 (capped at 16) whose double-buffered blocked
    inputs fit inside budget_bytes."""
    per_tb = img_frame_bytes + 3 * res_frame_bytes   # img_blk, gt_blk, next_res, present_res
    fixed = img_frame_bytes + res_frame_bytes        # img_edge, gt_edge
    best = 1
    for tb in range(1, min(t1, 16) + 1):
        if t1 % tb:
            continue
        if 2 * (tb * per_tb + fixed) <= budget_bytes:
            best = tb
    return best


def _loss_kernel(img_blk, img_edge, gt_blk, gt_edge, res_blk, pres_blk, out_ref,
                 *, tb, img_tiles, res_tiles):
    # Block i covers timesteps t = i*tb .. i*tb+tb-1.
    #   img_blk : (tb, Ci, Hi, Wi)  img[i*tb : i*tb+tb]
    #   img_edge: (1,  Ci, Hi, Wi)  img[i*tb+tb]           (t+1 of the last step)
    #   gt_blk  : (tb, C,  H,  W )  gt [i*tb : i*tb+tb]
    #   gt_edge : (1,  C,  H,  W )  gt [i*tb+tb]
    #   res_blk : (tb, C,  H,  W )  next_res[i*tb : i*tb+tb]
    #   pres_blk: (tb, C,  H,  W )  present_res[i*tb : i*tb+tb]
    l_lst = jnp.float32(0.0)
    l_reg = jnp.float32(0.0)

    for tl in range(tb):
        # ----- l_reg partial: sum((present_res[t] - gt[t])^2) over the frame.
        d_reg = pres_blk[tl] - gt_blk[tl]
        l_reg = l_reg + jnp.sum(d_reg * d_reg)

        # ----- l_lst partial: per sub-tile fused subtract/square/sum on ref views.
        for (ir0, ir1, ic0, ic1, c_img), (rr0, rr1, rc0, rc1, c_res) in zip(
                img_tiles, res_tiles):
            it = img_blk[tl, :, ir0:ir1, ic0:ic1]
            m1 = res_blk[tl, :, rr0:rr1, rc0:rc1]
            if tl + 1 < tb:
                it1 = img_blk[tl + 1, :, ir0:ir1, ic0:ic1]
                mg1 = gt_blk[tl + 1, :, rr0:rr1, rc0:rc1]
            else:
                it1 = img_edge[0, :, ir0:ir1, ic0:ic1]
                mg1 = gt_edge[0, :, rr0:rr1, rc0:rc1]
            d_img = it - it1
            sum_img = jnp.sum(d_img * d_img)
            d_res = m1 - mg1
            sum_res = jnp.sum(d_res * d_res)
            s = jnp.exp(sum_img * c_img)              # c_img = -1/(2*beta^2*n_img)
            l_lst = l_lst + s * (sum_res * c_res)     # c_res = 0.5/n_res

    out_ref[0] = jnp.concatenate(
        [jnp.full((1, 128), l_lst, dtype=jnp.float32),
         jnp.full((1, 128), l_reg, dtype=jnp.float32)], axis=0)


def pallas_loss(img, present_res, next_res, gt, *, w, h, lamda, beta):
    T, Ci, Hi, Wi = img.shape
    Tr, C, H, W = next_res.shape
    assert present_res.shape == next_res.shape == gt.shape
    assert Tr == T and T >= 2
    T1 = T - 1

    dph = _divide_points(H, h)
    dpw = _divide_points(W, w)
    idph = _divide_points(Hi, h)
    idpw = _divide_points(Wi, w)

    img_tiles, res_tiles = [], []
    for r in range(h):
        for c in range(w):
            ir0, ir1, ic0, ic1 = idph[r], idph[r + 1], idpw[c], idpw[c + 1]
            n_img = Ci * (ir1 - ir0) * (ic1 - ic0)
            img_tiles.append(
                (ir0, ir1, ic0, ic1, float(-1.0 / (2.0 * beta * beta * n_img))))
            rr0, rr1, rc0, rc1 = dph[r], dph[r + 1], dpw[c], dpw[c + 1]
            n_res = C * (rr1 - rr0) * (rc1 - rc0)
            res_tiles.append((rr0, rr1, rc0, rc1, float(0.5 / n_res)))

    img_frame_bytes = Ci * Hi * Wi * 4
    res_frame_bytes = C * H * W * 4

    # VMEM budget derived from the chip (128 MiB on v5e/v6e, 64 MiB on v7x);
    # the time block gets half of it (double buffering + compiler headroom).
    vmem_cap = _vmem_capacity_bytes()
    vmem_limit = min(vmem_cap * 3 // 4, 112 * 1024 * 1024)
    tb = _pick_time_block(T1, img_frame_bytes, res_frame_bytes,
                          budget_bytes=vmem_limit // 2)
    nb = T1 // tb

    kernel = functools.partial(
        _loss_kernel, tb=tb,
        img_tiles=tuple(img_tiles), res_tiles=tuple(res_tiles))

    cost = pl.CostEstimate(
        flops=T1 * (3 * Ci * Hi * Wi + 5 * C * H * W),
        transcendentals=T1 * h * w,
        bytes_accessed=(T1 + nb) * (img_frame_bytes + res_frame_bytes)
        + 2 * T1 * res_frame_bytes + nb * 2 * 128 * 4,
    )

    partials = pl.pallas_call(
        kernel,
        out_shape=jax.ShapeDtypeStruct((nb, 2, 128), jnp.float32),
        grid=(nb,),
        in_specs=[
            pl.BlockSpec((tb, Ci, Hi, Wi), lambda i: (i, 0, 0, 0)),           # img[i*tb : +tb]
            pl.BlockSpec((1, Ci, Hi, Wi), lambda i: (i * tb + tb, 0, 0, 0)),  # img[i*tb+tb]
            pl.BlockSpec((tb, C, H, W), lambda i: (i, 0, 0, 0)),              # gt[i*tb : +tb]
            pl.BlockSpec((1, C, H, W), lambda i: (i * tb + tb, 0, 0, 0)),     # gt[i*tb+tb]
            pl.BlockSpec((tb, C, H, W), lambda i: (i, 0, 0, 0)),              # next_res
            pl.BlockSpec((tb, C, H, W), lambda i: (i, 0, 0, 0)),              # present_res
        ],
        out_specs=pl.BlockSpec((1, 2, 128), lambda i: (i, 0, 0)),
        compiler_params=pltpu.CompilerParams(
            dimension_semantics=("parallel",),    # no carried state => safe to split
            vmem_limit_bytes=vmem_limit,
        ),
        cost_estimate=cost,
    )(img, img, gt, gt, next_res, present_res)

    l_lst = jnp.sum(partials[:, 0, 0]) / T1
    l_reg = jnp.sum(partials[:, 1, 0]) / float(T1 * C * H * W) * 0.5
    return l_reg + lamda * l_lst


def ref_loss(img, present_res, next_res, gt, *, w, h, lamda, beta):
    """Pure-JAX mirror of the PyTorch forward for verification."""
    mse = lambda a, b: jnp.mean((a - b) ** 2)
    l_reg = mse(present_res[:-1], gt[:-1]) * 0.5
    T, _, H, W = next_res.shape
    dph = _divide_points(H, h)
    dpw = _divide_points(W, w)
    Hi, Wi = img.shape[2:]
    idph = _divide_points(Hi, h)
    idpw = _divide_points(Wi, w)
    l_lst = 0.0
    for t in range(T - 1):
        for r in range(h):
            for c in range(w):
                it = img[t, :, idph[r]:idph[r + 1], idpw[c]:idpw[c + 1]]
                it1 = img[t + 1, :, idph[r]:idph[r + 1], idpw[c]:idpw[c + 1]]
                m1 = next_res[t, :, dph[r]:dph[r + 1], dpw[c]:dpw[c + 1]]
                mg1 = gt[t + 1, :, dph[r]:dph[r + 1], dpw[c]:dpw[c + 1]]
                s = jnp.exp(mse(it, it1) * -1 / 2 / beta ** 2)
                ms = mse(m1, mg1) / 2
                l_lst = l_lst + s * ms
    l_lst = l_lst / (T - 1)
    return l_reg + lamda * l_lst


if __name__ == "__main__":
    # Loss hyper-params (the module's __init__ args).  The module's `l_lst`
    # nn.Parameter (scalar zeros) is never used in forward, so no learned
    # weights are needed.
    h, w = 2, 2
    lamda, beta = 0.5, 1.0

    # Small shapes: T=3 time steps, residual maps (T, 4, 16, 256),
    # images (T, 3, 16, 256).  W=256 so each (h, w) sub-tile is (8, 128)-aligned.
    T, C, H, W = 3, 4, 16, 256
    Ci, Hi, Wi = 3, 16, 256

    key = jax.random.PRNGKey(0)
    k1, k2, k3, k4 = jax.random.split(key, 4)
    img = jax.random.normal(k1, (T, Ci, Hi, Wi), dtype=jnp.float32)
    present_res = jax.random.normal(k2, (T, C, H, W), dtype=jnp.float32)
    next_res = jax.random.normal(k3, (T, C, H, W), dtype=jnp.float32)
    gt = jax.random.normal(k4, (T, C, H, W), dtype=jnp.float32)

    loss = pallas_loss(img, present_res, next_res, gt,
                       w=w, h=h, lamda=lamda, beta=beta)
    loss = jax.block_until_ready(loss)

    expected = ref_loss(img, present_res, next_res, gt,
                        w=w, h=h, lamda=lamda, beta=beta)
    np.testing.assert_allclose(np.asarray(loss), np.asarray(expected),
                               rtol=1e-5, atol=1e-6)
    print("KERNEL_OK")
</pallas_src>

<mosaic_0001>
module attributes {stable_mosaic.version = 11 : i64} {
  func.func @_loss_kernel(%arg0: i32, %arg1: memref<2x3x16x256xf32, #tpu.memory_space<vmem>>, %arg2: memref<1x3x16x256xf32, #tpu.memory_space<vmem>>, %arg3: memref<2x4x16x256xf32, #tpu.memory_space<vmem>>, %arg4: memref<1x4x16x256xf32, #tpu.memory_space<vmem>>, %arg5: memref<2x4x16x256xf32, #tpu.memory_space<vmem>>, %arg6: memref<2x4x16x256xf32, #tpu.memory_space<vmem>>, %arg7: memref<1x2x128xf32, #tpu.memory_space<vmem>>) attributes {dimension_semantics = [#tpu.dimension_semantics<parallel>], iteration_bounds = array<i64: 1>, scalar_prefetch = 0 : i64, scratch_operands = 0 : i64, tpu.core_type = #tpu.core_type<tc>, window_params = [{transform_indices = @transform_0, window_bounds = array<i64: 2, 3, 16, 256>}, {transform_indices = @transform_1, window_bounds = array<i64: 1, 3, 16, 256>}, {transform_indices = @transform_2, window_bounds = array<i64: 2, 4, 16, 256>}, {transform_indices = @transform_3, window_bounds = array<i64: 1, 4, 16, 256>}, {transform_indices = @transform_4, window_bounds = array<i64: 2, 4, 16, 256>}, {transform_indices = @transform_5, window_bounds = array<i64: 2, 4, 16, 256>}, {transform_indices = @transform_6, window_bounds = array<i64: 1, 2, 128>}]} {
    %c0 = arith.constant 0 : index
    %c0_0 = arith.constant 0 : index
    %c0_1 = arith.constant 0 : index
    %c0_2 = arith.constant 0 : index
    %0 = vector.load %arg6[%c0, %c0_0, %c0_1, %c0_2] : memref<2x4x16x256xf32, #tpu.memory_space<vmem>>, vector<1x4x16x256xf32>
    %1 = vector.shape_cast %0 : vector<1x4x16x256xf32> to vector<4x16x256xf32>
    %c0_3 = arith.constant 0 : index
    %c0_4 = arith.constant 0 : index
    %c0_5 = arith.constant 0 : index
    %c0_6 = arith.constant 0 : index
    %2 = vector.load %arg3[%c0_3, %c0_4, %c0_5, %c0_6] : memref<2x4x16x256xf32, #tpu.memory_space<vmem>>, vector<1x4x16x256xf32>
    %3 = vector.shape_cast %2 : vector<1x4x16x256xf32> to vector<4x16x256xf32>
    %4 = arith.subf %1, %3 : vector<4x16x256xf32>
    %5 = arith.mulf %4, %4 : vector<4x16x256xf32>
    %6 = vector.shape_cast %5 : vector<4x16x256xf32> to vector<1x4x16x256xf32>
    %cst = arith.constant dense<0.000000e+00> : vector<1xf32>
    %7 = vector.multi_reduction <add>, %6, %cst [1, 2, 3] : vector<1x4x16x256xf32> to vector<1xf32>
    %8 = vector.shape_cast %7 : vector<1xf32> to vector<1x1x1x1xf32>
    %9 = vector.extract %8[0, 0, 0, 0] : f32 from vector<1x1x1x1xf32>
    %cst_7 = arith.constant 0.000000e+00 : f32
    %10 = arith.addf %cst_7, %9 : f32
    %c0_8 = arith.constant 0 : index
    %c0_9 = arith.constant 0 : index
    %c0_10 = arith.constant 0 : index
    %c0_11 = arith.constant 0 : index
    %11 = vector.load %arg1[%c0_8, %c0_9, %c0_10, %c0_11] : memref<2x3x16x256xf32, #tpu.memory_space<vmem>>, vector<1x3x8x128xf32>
    %12 = vector.shape_cast %11 : vector<1x3x8x128xf32> to vector<3x8x128xf32>
    %c0_12 = arith.constant 0 : index
    %c0_13 = arith.constant 0 : index
    %c0_14 = arith.constant 0 : index
    %c0_15 = arith.constant 0 : index
    %13 = vector.load %arg5[%c0_12, %c0_13, %c0_14, %c0_15] : memref<2x4x16x256xf32, #tpu.memory_space<vmem>>, vector<1x4x8x128xf32>
    %14 = vector.shape_cast %13 : vector<1x4x8x128xf32> to vector<4x8x128xf32>
    %c1 = arith.constant 1 : index
    %c0_16 = arith.constant 0 : index
    %c0_17 = arith.constant 0 : index
    %c0_18 = arith.constant 0 : index
    %15 = vector.load %arg1[%c1, %c0_16, %c0_17, %c0_18] : memref<2x3x16x256xf32, #tpu.memory_space<vmem>>, vector<1x3x8x128xf32>
    %16 = vector.shape_cast %15 : vector<1x3x8x128xf32> to vector<3x8x128xf32>
    %c1_19 = arith.constant 1 : index
    %c0_20 = arith.constant 0 : index
    %c0_21 = arith.constant 0 : index
    %c0_22 = arith.constant 0 : index
    %17 = vector.load %arg3[%c1_19, %c0_20, %c0_21, %c0_22] : memref<2x4x16x256xf32, #tpu.memory_space<vmem>>, vector<1x4x8x128xf32>
    %18 = vector.shape_cast %17 : vector<1x4x8x128xf32> to vector<4x8x128xf32>
    %19 = arith.subf %12, %16 : vector<3x8x128xf32>
    %20 = arith.mulf %19, %19 : vector<3x8x128xf32>
    %21 = vector.shape_cast %20 : vector<3x8x128xf32> to vector<1x3x8x128xf32>
    %cst_23 = arith.constant dense<0.000000e+00> : vector<1xf32>
    %22 = vector.multi_reduction <add>, %21, %cst_23 [1, 2, 3] : vector<1x3x8x128xf32> to vector<1xf32>
    %23 = vector.shape_cast %22 : vector<1xf32> to vector<1x1x1x1xf32>
    %24 = vector.extract %23[0, 0, 0, 0] : f32 from vector<1x1x1x1xf32>
    %25 = arith.subf %14, %18 : vector<4x8x128xf32>
    %26 = arith.mulf %25, %25 : vector<4x8x128xf32>
    %27 = vector.shape_cast %26 : vector<4x8x128xf32> to vector<1x4x8x128xf32>
    %cst_24 = arith.constant dense<0.000000e+00> : vector<1xf32>
    %28 = vector.multi_reduction <add>, %27, %cst_24 [1, 2, 3] : vector<1x4x8x128xf32> to vector<1xf32>
    %29 = vector.shape_cast %28 : vector<1xf32> to vector<1x1x1x1xf32>
    %30 = vector.extract %29[0, 0, 0, 0] : f32 from vector<1x1x1x1xf32>
    %cst_25 = arith.constant -1.62760422E-4 : f32
    %31 = arith.mulf %24, %cst_25 : f32
    %32 = math.exp %31 : f32
    %cst_26 = arith.constant 1.22070313E-4 : f32
    %33 = arith.mulf %30, %cst_26 : f32
    %34 = arith.mulf %32, %33 : f32
    %cst_27 = arith.constant 0.000000e+00 : f32
    %35 = arith.addf %cst_27, %34 : f32
    %c0_28 = arith.constant 0 : index
    %c0_29 = arith.constant 0 : index
    %c0_30 = arith.constant 0 : index
    %c128 = arith.constant 128 : index
    %36 = vector.load %arg1[%c0_28, %c0_29, %c0_30, %c128] : memref<2x3x16x256xf32, #tpu.memory_space<vmem>>, vector<1x3x8x128xf32>
    %37 = vector.shape_cast %36 : vector<1x3x8x128xf32> to vector<3x8x128xf32>
    %c0_31 = arith.constant 0 : index
    %c0_32 = arith.constant 0 : index
    %c0_33 = arith.constant 0 : index
    %c128_34 = arith.constant 128 : index
    %38 = vector.load %arg5[%c0_31, %c0_32, %c0_33, %c128_34] : memref<2x4x16x256xf32, #tpu.memory_space<vmem>>, vector<1x4x8x128xf32>
    %39 = vector.shape_cast %38 : vector<1x4x8x128xf32> to vector<4x8x128xf32>
    %c1_35 = arith.constant 1 : index
    %c0_36 = arith.constant 0 : index
    %c0_37 = arith.constant 0 : index
    %c128_38 = arith.constant 128 : index
    %40 = vector.load %arg1[%c1_35, %c0_36, %c0_37, %c128_38] : memref<2x3x16x256xf32, #tpu.memory_space<vmem>>, vector<1x3x8x128xf32>
    %41 = vector.shape_cast %40 : vector<1x3x8x128xf32> to vector<3x8x128xf32>
    %c1_39 = arith.constant 1 : index
    %c0_40 = arith.constant 0 : index
    %c0_41 = arith.constant 0 : index
    %c128_42 = arith.constant 128 : index
    %42 = vector.load %arg3[%c1_39, %c0_40, %c0_41, %c128_42] : memref<2x4x16x256xf32, #tpu.memory_space<vmem>>, vector<1x4x8x128xf32>
    %43 = vector.shape_cast %42 : vector<1x4x8x128xf32> to vector<4x8x128xf32>
    %44 = arith.subf %37, %41 : vector<3x8x128xf32>
    %45 = arith.mulf %44, %44 : vector<3x8x128xf32>
    %46 = vector.shape_cast %45 : vector<3x8x128xf32> to vector<1x3x8x128xf32>
    %cst_43 = arith.constant dense<0.000000e+00> : vector<1xf32>
    %47 = vector.multi_reduction <add>, %46, %cst_43 [1, 2, 3] : vector<1x3x8x128xf32> to vector<1xf32>
    %48 = vector.shape_cast %47 : vector<1xf32> to vector<1x1x1x1xf32>
    %49 = vector.extract %48[0, 0, 0, 0] : f32 from vector<1x1x1x1xf32>
    %50 = arith.subf %39, %43 : vector<4x8x128xf32>
    %51 = arith.mulf %50, %50 : vector<4x8x128xf32>
    %52 = vector.shape_cast %51 : vector<4x8x128xf32> to vector<1x4x8x128xf32>
    %cst_44 = arith.constant dense<0.000000e+00> : vector<1xf32>
    %53 = vector.multi_reduction <add>, %52, %cst_44 [1, 2, 3] : vector<1x4x8x128xf32> to vector<1xf32>
    %54 = vector.shape_cast %53 : vector<1xf32> to vector<1x1x1x1xf32>
    %55 = vector.extract %54[0, 0, 0, 0] : f32 from vector<1x1x1x1xf32>
    %cst_45 = arith.constant -1.62760422E-4 : f32
    %56 = arith.mulf %49, %cst_45 : f32
    %57 = math.exp %56 : f32
    %cst_46 = arith.constant 1.22070313E-4 : f32
    %58 = arith.mulf %55, %cst_46 : f32
    %59 = arith.mulf %57, %58 : f32
    %60 = arith.addf %35, %59 : f32
    %c0_47 = arith.constant 0 : index
    %c0_48 = arith.constant 0 : index
    %c8 = arith.constant 8 : index
    %c0_49 = arith.constant 0 : index
    %61 = vector.load %arg1[%c0_47, %c0_48, %c8, %c0_49] : memref<2x3x16x256xf32, #tpu.memory_space<vmem>>, vector<1x3x8x128xf32>
    %62 = vector.shape_cast %61 : vector<1x3x8x128xf32> to vector<3x8x128xf32>
    %c0_50 = arith.constant 0 : index
    %c0_51 = arith.constant 0 : index
    %c8_52 = arith.constant 8 : index
    %c0_53 = arith.constant 0 : index
    %63 = vector.load %arg5[%c0_50, %c0_51, %c8_52, %c0_53] : memref<2x4x16x256xf32, #tpu.memory_space<vmem>>, vector<1x4x8x128xf32>
    %64 = vector.shape_cast %63 : vector<1x4x8x128xf32> to vector<4x8x128xf32>
    %c1_54 = arith.constant 1 : index
    %c0_55 = arith.constant 0 : index
    %c8_56 = arith.constant 8 : index
    %c0_57 = arith.constant 0 : index
    %65 = vector.load %arg1[%c1_54, %c0_55, %c8_56, %c0_57] : memref<2x3x16x256xf32, #tpu.memory_space<vmem>>, vector<1x3x8x128xf32>
    %66 = vector.shape_cast %65 : vector<1x3x8x128xf32> to vector<3x8x128xf32>
    %c1_58 = arith.constant 1 : index
    %c0_59 = arith.constant 0 : index
    %c8_60 = arith.constant 8 : index
    %c0_61 = arith.constant 0 : index
    %67 = vector.load %arg3[%c1_58, %c0_59, %c8_60, %c0_61] : memref<2x4x16x256xf32, #tpu.memory_space<vmem>>, vector<1x4x8x128xf32>
    %68 = vector.shape_cast %67 : vector<1x4x8x128xf32> to vector<4x8x128xf32>
    %69 = arith.subf %62, %66 : vector<3x8x128xf32>
    %70 = arith.mulf %69, %69 : vector<3x8x128xf32>
    %71 = vector.shape_cast %70 : vector<3x8x128xf32> to vector<1x3x8x128xf32>
    %cst_62 = arith.constant dense<0.000000e+00> : vector<1xf32>
    %72 = vector.multi_reduction <add>, %71, %cst_62 [1, 2, 3] : vector<1x3x8x128xf32> to vector<1xf32>
    %73 = vector.shape_cast %72 : vector<1xf32> to vector<1x1x1x1xf32>
    %74 = vector.extract %73[0, 0, 0, 0] : f32 from vector<1x1x1x1xf32>
    %75 = arith.subf %64, %68 : vector<4x8x128xf32>
    %76 = arith.mulf %75, %75 : vector<4x8x128xf32>
    %77 = vector.shape_cast %76 : vector<4x8x128xf32> to vector<1x4x8x128xf32>
    %cst_63 = arith.constant dense<0.000000e+00> : vector<1xf32>
    %78 = vector.multi_reduction <add>, %77, %cst_63 [1, 2, 3] : vector<1x4x8x128xf32> to vector<1xf32>
    %79 = vector.shape_cast %78 : vector<1xf32> to vector<1x1x1x1xf32>
    %80 = vector.extract %79[0, 0, 0, 0] : f32 from vector<1x1x1x1xf32>
    %cst_64 = arith.constant -1.62760422E-4 : f32
    %81 = arith.mulf %74, %cst_64 : f32
    %82 = math.exp %81 : f32
    %cst_65 = arith.constant 1.22070313E-4 : f32
    %83 = arith.mulf %80, %cst_65 : f32
    %84 = arith.mulf %82, %83 : f32
    %85 = arith.addf %60, %84 : f32
    %c0_66 = arith.constant 0 : index
    %c0_67 = arith.constant 0 : index
    %c8_68 = arith.constant 8 : index
    %c128_69 = arith.constant 128 : index
    %86 = vector.load %arg1[%c0_66, %c0_67, %c8_68, %c128_69] : memref<2x3x16x256xf32, #tpu.memory_space<vmem>>, vector<1x3x8x128xf32>
    %87 = vector.shape_cast %86 : vector<1x3x8x128xf32> to vector<3x8x128xf32>
    %c0_70 = arith.constant 0 : index
    %c0_71 = arith.constant 0 : index
    %c8_72 = arith.constant 8 : index
    %c128_73 = arith.constant 128 : index
    %88 = vector.load %arg5[%c0_70, %c0_71, %c8_72, %c128_73] : memref<2x4x16x256xf32, #tpu.memory_space<vmem>>, vector<1x4x8x128xf32>
    %89 = vector.shape_cast %88 : vector<1x4x8x128xf32> to vector<4x8x128xf32>
    %c1_74 = arith.constant 1 : index
    %c0_75 = arith.constant 0 : index
    %c8_76 = arith.constant 8 : index
    %c128_77 = arith.constant 128 : index
    %90 = vector.load %arg1[%c1_74, %c0_75, %c8_76, %c128_77] : memref<2x3x16x256xf32, #tpu.memory_space<vmem>>, vector<1x3x8x128xf32>
    %91 = vector.shape_cast %90 : vector<1x3x8x128xf32> to vector<3x8x128xf32>
    %c1_78 = arith.constant 1 : index
    %c0_79 = arith.constant 0 : index
    %c8_80 = arith.constant 8 : index
    %c128_81 = arith.constant 128 : index
    %92 = vector.load %arg3[%c1_78, %c0_79, %c8_80, %c128_81] : memref<2x4x16x256xf32, #tpu.memory_space<vmem>>, vector<1x4x8x128xf32>
    %93 = vector.shape_cast %92 : vector<1x4x8x128xf32> to vector<4x8x128xf32>
    %94 = arith.subf %87, %91 : vector<3x8x128xf32>
    %95 = arith.mulf %94, %94 : vector<3x8x128xf32>
    %96 = vector.shape_cast %95 : vector<3x8x128xf32> to vector<1x3x8x128xf32>
    %cst_82 = arith.constant dense<0.000000e+00> : vector<1xf32>
    %97 = vector.multi_reduction <add>, %96, %cst_82 [1, 2, 3] : vector<1x3x8x128xf32> to vector<1xf32>
    %98 = vector.shape_cast %97 : vector<1xf32> to vector<1x1x1x1xf32>
    %99 = vector.extract %98[0, 0, 0, 0] : f32 from vector<1x1x1x1xf32>
    %100 = arith.subf %89, %93 : vector<4x8x128xf32>
    %101 = arith.mulf %100, %100 : vector<4x8x128xf32>
    %102 = vector.shape_cast %101 : vector<4x8x128xf32> to vector<1x4x8x128xf32>
    %cst_83 = arith.constant dense<0.000000e+00> : vector<1xf32>
    %103 = vector.multi_reduction <add>, %102, %cst_83 [1, 2, 3] : vector<1x4x8x128xf32> to vector<1xf32>
    %104 = vector.shape_cast %103 : vector<1xf32> to vector<1x1x1x1xf32>
    %105 = vector.extract %104[0, 0, 0, 0] : f32 from vector<1x1x1x1xf32>
    %cst_84 = arith.constant -1.62760422E-4 : f32
    %106 = arith.mulf %99, %cst_84 : f32
    %107 = math.exp %106 : f32
    %cst_85 = arith.constant 1.22070313E-4 : f32
    %108 = arith.mulf %105, %cst_85 : f32
    %109 = arith.mulf %107, %108 : f32
    %110 = arith.addf %85, %109 : f32
    %c1_86 = arith.constant 1 : index
    %c0_87 = arith.constant 0 : index
    %c0_88 = arith.constant 0 : index
    %c0_89 = arith.constant 0 : index
    %111 = vector.load %arg6[%c1_86, %c0_87, %c0_88, %c0_89] : memref<2x4x16x256xf32, #tpu.memory_space<vmem>>, vector<1x4x16x256xf32>
    %112 = vector.shape_cast %111 : vector<1x4x16x256xf32> to vector<4x16x256xf32>
    %c1_90 = arith.constant 1 : index
    %c0_91 = arith.constant 0 : index
    %c0_92 = arith.constant 0 : index
    %c0_93 = arith.constant 0 : index
    %113 = vector.load %arg3[%c1_90, %c0_91, %c0_92, %c0_93] : memref<2x4x16x256xf32, #tpu.memory_space<vmem>>, vector<1x4x16x256xf32>
    %114 = vector.shape_cast %113 : vector<1x4x16x256xf32> to vector<4x16x256xf32>
    %115 = arith.subf %112, %114 : vector<4x16x256xf32>
    %116 = arith.mulf %115, %115 : vector<4x16x256xf32>
    %117 = vector.shape_cast %116 : vector<4x16x256xf32> to vector<1x4x16x256xf32>
    %cst_94 = arith.constant dense<0.000000e+00> : vector<1xf32>
    %118 = vector.multi_reduction <add>, %117, %cst_94 [1, 2, 3] : vector<1x4x16x256xf32> to vector<1xf32>
    %119 = vector.shape_cast %118 : vector<1xf32> to vector<1x1x1x1xf32>
    %120 = vector.extract %119[0, 0, 0, 0] : f32 from vector<1x1x1x1xf32>
    %121 = arith.addf %10, %120 : f32
    %c1_95 = arith.constant 1 : index
    %c0_96 = arith.constant 0 : index
    %c0_97 = arith.constant 0 : index
    %c0_98 = arith.constant 0 : index
    %122 = vector.load %arg1[%c1_95, %c0_96, %c0_97, %c0_98] : memref<2x3x16x256xf32, #tpu.memory_space<vmem>>, vector<1x3x8x128xf32>
    %123 = vector.shape_cast %122 : vector<1x3x8x128xf32> to vector<3x8x128xf32>
    %c1_99 = arith.constant 1 : index
    %c0_100 = arith.constant 0 : index
    %c0_101 = arith.constant 0 : index
    %c0_102 = arith.constant 0 : index
    %124 = vector.load %arg5[%c1_99, %c0_100, %c0_101, %c0_102] : memref<2x4x16x256xf32, #tpu.memory_space<vmem>>, vector<1x4x8x128xf32>
    %125 = vector.shape_cast %124 : vector<1x4x8x128xf32> to vector<4x8x128xf32>
    %c0_103 = arith.constant 0 : index
    %c0_104 = arith.constant 0 : index
    %c0_105 = arith.constant 0 : index
    %c0_106 = arith.constant 0 : index
    %126 = vector.load %arg2[%c0_103, %c0_104, %c0_105, %c0_106] : memref<1x3x16x256xf32, #tpu.memory_space<vmem>>, vector<1x3x8x128xf32>
    %127 = vector.shape_cast %126 : vector<1x3x8x128xf32> to vector<3x8x128xf32>
    %c0_107 = arith.constant 0 : index
    %c0_108 = arith.constant 0 : index
    %c0_109 = arith.constant 0 : index
    %c0_110 = arith.constant 0 : index
    %128 = vector.load %arg4[%c0_107, %c0_108, %c0_109, %c0_110] : memref<1x4x16x256xf32, #tpu.memory_space<vmem>>, vector<1x4x8x128xf32>
    %129 = vector.shape_cast %128 : vector<1x4x8x128xf32> to vector<4x8x128xf32>
    %130 = arith.subf %123, %127 : vector<3x8x128xf32>
    %131 = arith.mulf %130, %130 : vector<3x8x128xf32>
    %132 = vector.shape_cast %131 : vector<3x8x128xf32> to vector<1x3x8x128xf32>
    %cst_111 = arith.constant dense<0.000000e+00> : vector<1xf32>
    %133 = vector.multi_reduction <add>, %132, %cst_111 [1, 2, 3] : vector<1x3x8x128xf32> to vector<1xf32>
    %134 = vector.shape_cast %133 : vector<1xf32> to vector<1x1x1x1xf32>
    %135 = vector.extract %134[0, 0, 0, 0] : f32 from vector<1x1x1x1xf32>
    %136 = arith.subf %125, %129 : vector<4x8x128xf32>
    %137 = arith.mulf %136, %136 : vector<4x8x128xf32>
    %138 = vector.shape_cast %137 : vector<4x8x128xf32> to vector<1x4x8x128xf32>
    %cst_112 = arith.constant dense<0.000000e+00> : vector<1xf32>
    %139 = vector.multi_reduction <add>, %138, %cst_112 [1, 2, 3] : vector<1x4x8x128xf32> to vector<1xf32>
    %140 = vector.shape_cast %139 : vector<1xf32> to vector<1x1x1x1xf32>
    %141 = vector.extract %140[0, 0, 0, 0] : f32 from vector<1x1x1x1xf32>
    %cst_113 = arith.constant -1.62760422E-4 : f32
    %142 = arith.mulf %135, %cst_113 : f32
    %143 = math.exp %142 : f32
    %cst_114 = arith.constant 1.22070313E-4 : f32
    %144 = arith.mulf %141, %cst_114 : f32
    %145 = arith.mulf %143, %144 : f32
    %146 = arith.addf %110, %145 : f32
    %c1_115 = arith.constant 1 : index
    %c0_116 = arith.constant 0 : index
    %c0_117 = arith.constant 0 : index
    %c128_118 = arith.constant 128 : index
    %147 = vector.load %arg1[%c1_115, %c0_116, %c0_117, %c128_118] : memref<2x3x16x256xf32, #tpu.memory_space<vmem>>, vector<1x3x8x128xf32>
    %148 = vector.shape_cast %147 : vector<1x3x8x128xf32> to vector<3x8x128xf32>
    %c1_119 = arith.constant 1 : index
    %c0_120 = arith.constant 0 : index
    %c0_121 = arith.constant 0 : index
    %c128_122 = arith.constant 128 : index
    %149 = vector.load %arg5[%c1_119, %c0_120, %c0_121, %c128_122] : memref<2x4x16x256xf32, #tpu.memory_space<vmem>>, vector<1x4x8x128xf32>
    %150 = vector.shape_cast %149 : vector<1x4x8x128xf32> to vector<4x8x128xf32>
    %c0_123 = arith.constant 0 : index
    %c0_124 = arith.constant 0 : index
    %c0_125 = arith.constant 0 : index
    %c128_126 = arith.constant 128 : index
    %151 = vector.load %arg2[%c0_123, %c0_124, %c0_125, %c128_126] : memref<1x3x16x256xf32, #tpu.memory_space<vmem>>, vector<1x3x8x128xf32>
    %152 = vector.shape_cast %151 : vector<1x3x8x128xf32> to vector<3x8x128xf32>
    %c0_127 = arith.constant 0 : index
    %c0_128 = arith.constant 0 : index
    %c0_129 = arith.constant 0 : index
    %c128_130 = arith.constant 128 : index
    %153 = vector.load %arg4[%c0_127, %c0_128, %c0_129, %c128_130] : memref<1x4x16x256xf32, #tpu.memory_space<vmem>>, vector<1x4x8x128xf32>
    %154 = vector.shape_cast %153 : vector<1x4x8x128xf32> to vector<4x8x128xf32>
    %155 = arith.subf %148, %152 : vector<3x8x128xf32>
    %156 = arith.mulf %155, %155 : vector<3x8x128xf32>
    %157 = vector.shape_cast %156 : vector<3x8x128xf32> to vector<1x3x8x128xf32>
    %cst_131 = arith.constant dense<0.000000e+00> : vector<1xf32>
    %158 = vector.multi_reduction <add>, %157, %cst_131 [1, 2, 3] : vector<1x3x8x128xf32> to vector<1xf32>
    %159 = vector.shape_cast %158 : vector<1xf32> to vector<1x1x1x1xf32>
    %160 = vector.extract %159[0, 0, 0, 0] : f32 from vector<1x1x1x1xf32>
    %161 = arith.subf %150, %154 : vector<4x8x128xf32>
    %162 = arith.mulf %161, %161 : vector<4x8x128xf32>
    %163 = vector.shape_cast %162 : vector<4x8x128xf32> to vector<1x4x8x128xf32>
    %cst_132 = arith.constant dense<0.000000e+00> : vector<1xf32>
    %164 = vector.multi_reduction <add>, %163, %cst_132 [1, 2, 3] : vector<1x4x8x128xf32> to vector<1xf32>
    %165 = vector.shape_cast %164 : vector<1xf32> to vector<1x1x1x1xf32>
    %166 = vector.extract %165[0, 0, 0, 0] : f32 from vector<1x1x1x1xf32>
    %cst_133 = arith.constant -1.62760422E-4 : f32
    %167 = arith.mulf %160, %cst_133 : f32
    %168 = math.exp %167 : f32
    %cst_134 = arith.constant 1.22070313E-4 : f32
    %169 = arith.mulf %166, %cst_134 : f32
    %170 = arith.mulf %168, %169 : f32
    %171 = arith.addf %146, %170 : f32
    %c1_135 = arith.constant 1 : index
    %c0_136 = arith.constant 0 : index
    %c8_137 = arith.constant 8 : index
    %c0_138 = arith.constant 0 : index
    %172 = vector.load %arg1[%c1_135, %c0_136, %c8_137, %c0_138] : memref<2x3x16x256xf32, #tpu.memory_space<vmem>>, vector<1x3x8x128xf32>
    %173 = vector.shape_cast %172 : vector<1x3x8x128xf32> to vector<3x8x128xf32>
    %c1_139 = arith.constant 1 : index
    %c0_140 = arith.constant 0 : index
    %c8_141 = arith.constant 8 : index
    %c0_142 = arith.constant 0 : index
    %174 = vector.load %arg5[%c1_139, %c0_140, %c8_141, %c0_142] : memref<2x4x16x256xf32, #tpu.memory_space<vmem>>, vector<1x4x8x128xf32>
    %175 = vector.shape_cast %174 : vector<1x4x8x128xf32> to vector<4x8x128xf32>
    %c0_143 = arith.constant 0 : index
    %c0_144 = arith.constant 0 : index
    %c8_145 = arith.constant 8 : index
    %c0_146 = arith.constant 0 : index
    %176 = vector.load %arg2[%c0_143, %c0_144, %c8_145, %c0_146] : memref<1x3x16x256xf32, #tpu.memory_space<vmem>>, vector<1x3x8x128xf32>
    %177 = vector.shape_cast %176 : vector<1x3x8x128xf32> to vector<3x8x128xf32>
    %c0_147 = arith.constant 0 : index
    %c0_148 = arith.constant 0 : index
    %c8_149 = arith.constant 8 : index
    %c0_150 = arith.constant 0 : index
    %178 = vector.load %arg4[%c0_147, %c0_148, %c8_149, %c0_150] : memref<1x4x16x256xf32, #tpu.memory_space<vmem>>, vector<1x4x8x128xf32>
    %179 = vector.shape_cast %178 : vector<1x4x8x128xf32> to vector<4x8x128xf32>
    %180 = arith.subf %173, %177 : vector<3x8x128xf32>
    %181 = arith.mulf %180, %180 : vector<3x8x128xf32>
    %182 = vector.shape_cast %181 : vector<3x8x128xf32> to vector<1x3x8x128xf32>
    %cst_151 = arith.constant dense<0.000000e+00> : vector<1xf32>
    %183 = vector.multi_reduction <add>, %182, %cst_151 [1, 2, 3] : vector<1x3x8x128xf32> to vector<1xf32>
    %184 = vector.shape_cast %183 : vector<1xf32> to vector<1x1x1x1xf32>
    %185 = vector.extract %184[0, 0, 0, 0] : f32 from vector<1x1x1x1xf32>
    %186 = arith.subf %175, %179 : vector<4x8x128xf32>
    %187 = arith.mulf %186, %186 : vector<4x8x128xf32>
    %188 = vector.shape_cast %187 : vector<4x8x128xf32> to vector<1x4x8x128xf32>
    %cst_152 = arith.constant dense<0.000000e+00> : vector<1xf32>
    %189 = vector.multi_reduction <add>, %188, %cst_152 [1, 2, 3] : vector<1x4x8x128xf32> to vector<1xf32>
    %190 = vector.shape_cast %189 : vector<1xf32> to vector<1x1x1x1xf32>
    %191 = vector.extract %190[0, 0, 0, 0] : f32 from vector<1x1x1x1xf32>
    %cst_153 = arith.constant -1.62760422E-4 : f32
    %192 = arith.mulf %185, %cst_153 : f32
    %193 = math.exp %192 : f32
    %cst_154 = arith.constant 1.22070313E-4 : f32
    %194 = arith.mulf %191, %cst_154 : f32
    %195 = arith.mulf %193, %194 : f32
    %196 = arith.addf %171, %195 : f32
    %c1_155 = arith.constant 1 : index
    %c0_156 = arith.constant 0 : index
    %c8_157 = arith.constant 8 : index
    %c128_158 = arith.constant 128 : index
    %197 = vector.load %arg1[%c1_155, %c0_156, %c8_157, %c128_158] : memref<2x3x16x256xf32, #tpu.memory_space<vmem>>, vector<1x3x8x128xf32>
    %198 = vector.shape_cast %197 : vector<1x3x8x128xf32> to vector<3x8x128xf32>
    %c1_159 = arith.constant 1 : index
    %c0_160 = arith.constant 0 : index
    %c8_161 = arith.constant 8 : index
    %c128_162 = arith.constant 128 : index
    %199 = vector.load %arg5[%c1_159, %c0_160, %c8_161, %c128_162] : memref<2x4x16x256xf32, #tpu.memory_space<vmem>>, vector<1x4x8x128xf32>
    %200 = vector.shape_cast %199 : vector<1x4x8x128xf32> to vector<4x8x128xf32>
    %c0_163 = arith.constant 0 : index
    %c0_164 = arith.constant 0 : index
    %c8_165 = arith.constant 8 : index
    %c128_166 = arith.constant 128 : index
    %201 = vector.load %arg2[%c0_163, %c0_164, %c8_165, %c128_166] : memref<1x3x16x256xf32, #tpu.memory_space<vmem>>, vector<1x3x8x128xf32>
    %202 = vector.shape_cast %201 : vector<1x3x8x128xf32> to vector<3x8x128xf32>
    %c0_167 = arith.constant 0 : index
    %c0_168 = arith.constant 0 : index
    %c8_169 = arith.constant 8 : index
    %c128_170 = arith.constant 128 : index
    %203 = vector.load %arg4[%c0_167, %c0_168, %c8_169, %c128_170] : memref<1x4x16x256xf32, #tpu.memory_space<vmem>>, vector<1x4x8x128xf32>
    %204 = vector.shape_cast %203 : vector<1x4x8x128xf32> to vector<4x8x128xf32>
    %205 = arith.subf %198, %202 : vector<3x8x128xf32>
    %206 = arith.mulf %205, %205 : vector<3x8x128xf32>
    %207 = vector.shape_cast %206 : vector<3x8x128xf32> to vector<1x3x8x128xf32>
    %cst_171 = arith.constant dense<0.000000e+00> : vector<1xf32>
    %208 = vector.multi_reduction <add>, %207, %cst_171 [1, 2, 3] : vector<1x3x8x128xf32> to vector<1xf32>
    %209 = vector.shape_cast %208 : vector<1xf32> to vector<1x1x1x1xf32>
    %210 = vector.extract %209[0, 0, 0, 0] : f32 from vector<1x1x1x1xf32>
    %211 = arith.subf %200, %204 : vector<4x8x128xf32>
    %212 = arith.mulf %211, %211 : vector<4x8x128xf32>
    %213 = vector.shape_cast %212 : vector<4x8x128xf32> to vector<1x4x8x128xf32>
    %cst_172 = arith.constant dense<0.000000e+00> : vector<1xf32>
    %214 = vector.multi_reduction <add>, %213, %cst_172 [1, 2, 3] : vector<1x4x8x128xf32> to vector<1xf32>
    %215 = vector.shape_cast %214 : vector<1xf32> to vector<1x1x1x1xf32>
    %216 = vector.extract %215[0, 0, 0, 0] : f32 from vector<1x1x1x1xf32>
    %cst_173 = arith.constant -1.62760422E-4 : f32
    %217 = arith.mulf %210, %cst_173 : f32
    %218 = math.exp %217 : f32
    %cst_174 = arith.constant 1.22070313E-4 : f32
    %219 = arith.mulf %216, %cst_174 : f32
    %220 = arith.mulf %218, %219 : f32
    %221 = arith.addf %196, %220 : f32
    %222 = vector.broadcast %221 : f32 to vector<1x128xf32>
    %223 = vector.broadcast %121 : f32 to vector<1x128xf32>
    %224 = tpu.concatenate %222, %223 in 0 : vector<1x128xf32>, vector<1x128xf32> -> vector<2x128xf32>
    %c0_175 = arith.constant 0 : index
    %c0_176 = arith.constant 0 : index
    %c0_177 = arith.constant 0 : index
    %225 = vector.load %arg7[%c0_175, %c0_176, %c0_177] : memref<1x2x128xf32, #tpu.memory_space<vmem>>, vector<1x2x128xf32>
    %226 = vector.shape_cast %225 : vector<1x2x128xf32> to vector<2x128xf32>
    %227 = vector.shape_cast %224 : vector<2x128xf32> to vector<1x2x128xf32>
    tpu.vector_store %arg7[%c0_175, %c0_176, %c0_177], %227 {strides = array<i32>} : memref<1x2x128xf32, #tpu.memory_space<vmem>>, vector<1x2x128xf32>,
    return
  }
  func.func @transform_0(%arg0: i32) -> (i32, i32, i32, i32) {
    %c0_i32 = arith.constant 0 : i32
    %c0_i32_0 = arith.constant 0 : i32
    %c0_i32_1 = arith.constant 0 : i32
    %c0_i32_2 = arith.constant 0 : i32
    return %arg0, %c0_i32, %c0_i32_0, %c0_i32_1 : i32, i32, i32, i32
  }
  func.func @transform_1(%arg0: i32) -> (i32, i32, i32, i32) {
    %c2_i32 = arith.constant 2 : i32
    %0 = arith.muli %arg0, %c2_i32 : i32
    %c2_i32_0 = arith.constant 2 : i32
    %1 = arith.addi %0, %c2_i32_0 : i32
    %c0_i32 = arith.constant 0 : i32
    %c0_i32_1 = arith.constant 0 : i32
    %c0_i32_2 = arith.constant 0 : i32
    %c0_i32_3 = arith.constant 0 : i32
    return %1, %c0_i32, %c0_i32_1, %c0_i32_2 : i32, i32, i32, i32
  }
  func.func @transform_2(%arg0: i32) -> (i32, i32, i32, i32) {
    %c0_i32 = arith.constant 0 : i32
    %c0_i32_0 = arith.constant 0 : i32
    %c0_i32_1 = arith.constant 0 : i32
    %c0_i32_2 = arith.constant 0 : i32
    return %arg0, %c0_i32, %c0_i32_0, %c0_i32_1 : i32, i32, i32, i32
  }
  func.func @transform_3(%arg0: i32) -> (i32, i32, i32, i32) {
    %c2_i32 = arith.constant 2 : i32
    %0 = arith.muli %arg0, %c2_i32 : i32
    %c2_i32_0 = arith.constant 2 : i32
    %1 = arith.addi %0, %c2_i32_0 : i32
    %c0_i32 = arith.constant 0 : i32
    %c0_i32_1 = arith.constant 0 : i32
    %c0_i32_2 = arith.constant 0 : i32
    %c0_i32_3 = arith.constant 0 : i32
    return %1, %c0_i32, %c0_i32_1, %c0_i32_2 : i32, i32, i32, i32
  }
  func.func @transform_4(%arg0: i32) -> (i32, i32, i32, i32) {
    %c0_i32 = arith.constant 0 : i32
    %c0_i32_0 = arith.constant 0 : i32
    %c0_i32_1 = arith.constant 0 : i32
    %c0_i32_2 = arith.constant 0 : i32
    return %arg0, %c0_i32, %c0_i32_0, %c0_i32_1 : i32, i32, i32, i32
  }
  func.func @transform_5(%arg0: i32) -> (i32, i32, i32, i32) {
    %c0_i32 = arith.constant 0 : i32
    %c0_i32_0 = arith.constant 0 : i32
    %c0_i32_1 = arith.constant 0 : i32
    %c0_i32_2 = arith.constant 0 : i32
    return %arg0, %c0_i32, %c0_i32_0, %c0_i32_1 : i32, i32, i32, i32
  }
  func.func @transform_6(%arg0: i32) -> (i32, i32, i32) {
    %c0_i32 = arith.constant 0 : i32
    %c0_i32_0 = arith.constant 0 : i32
    %c0_i32_1 = arith.constant 0 : i32
    return %arg0, %c0_i32, %c0_i32_0 : i32, i32, i32
  }
}

</mosaic_0001>

<llo_original>
// kernel: tpu_custom_call.1
$region0: #{tpu_custom_call.1}
  #allocation0 [shape = 'u32[]', space=smem, size = 0x4, offset = 0x4, fixed_abs, tag = 'smem constant byte address 0x4 - core index']
  #allocation1 [shape = 'u32[144,128]{1,0:T(1,128)}', space=vmem, size = 0x12000, scoped, tag = 'internal scratch']
  %s0 = inlined_call_operand.hbm [shape: f32[3,3,16,256], index: 0, kind: input, shape index: {}]
  %s1 = inlined_call_operand.hbm [shape: f32[3,3,16,256], index: 1, kind: input, shape index: {}]
  %s2 = inlined_call_operand.hbm [shape: f32[3,4,16,256], index: 2, kind: input, shape index: {}]
  %s3 = inlined_call_operand.hbm [shape: f32[3,4,16,256], index: 3, kind: input, shape index: {}]
  %s4 = inlined_call_operand.hbm [shape: f32[3,4,16,256], index: 4, kind: input, shape index: {}]
  %s5 = inlined_call_operand.hbm [shape: f32[3,4,16,256], index: 5, kind: input, shape index: {}]
  %s6 = inlined_call_operand.hbm [shape: f32[1,2,128], index: 6, kind: output, shape index: {}]
  %s7 = sld [smem:[#allocation0]]
  $region58: #{tpu_custom_call.1} parent=0
    _
  %s9 = ssub.s32 1, %s7
  %s10 = scalar_select 0, %s9, %s7
  $region1: #{tpu_custom_call.1} parent=0
    #allocation2 [shape = 'u8[98304]{0}', space=vmem, size = 0x18000, scoped, tag = 'input window, operand 0, single buffered']
    #allocation3 [shape = 's32[1]{0}', space=sflag, size = 0x4, scoped, tag = 'scoped memory for tpu_custom_call.1']
    #allocation4 [shape = 's32[1]{0}', space=sflag, size = 0x4, scoped, tag = 'scoped memory for tpu_custom_call.1']
    #allocation5 [shape = 'u8[49152]{0}', space=vmem, size = 0xc000, scoped, tag = 'input window, operand 1, single buffered']
    #allocation6 [shape = 's32[1]{0}', space=sflag, size = 0x4, scoped, tag = 'scoped memory for tpu_custom_call.1']
    #allocation7 [shape = 'u8[131072]{0}', space=vmem, size = 0x20000, scoped, tag = 'input window, operand 2, single buffered']
    #allocation8 [shape = 'u8[65536]{0}', space=vmem, size = 0x10000, scoped, tag = 'input window, operand 3, single buffered']
    #allocation9 [shape = 's32[1]{0}', space=sflag, size = 0x4, scoped, tag = 'scoped memory for tpu_custom_call.1']
    #allocation10 [shape = 'u8[131072]{0}', space=vmem, size = 0x20000, scoped, tag = 'input window, operand 4, single buffered']
    #allocation11 [shape = 'u8[131072]{0}', space=vmem, size = 0x20000, scoped, tag = 'input window, operand 5, single buffered']
    #allocation12 [shape = 's32[1]{0}', space=sflag, size = 0x4, scoped, tag = 'scoped memory for tpu_custom_call.1']
    #allocation13 [shape = 'u8[1024]{0}', space=vmem, size = 0x400, scoped, tag = 'output window, operand 0, single buffered']
    %11 = vsyncpa [#allocation3], 0
    %12 = vsyncpa [#allocation6], 0
    %13 = vsyncpa [#allocation9], 0
    %14 = vsyncpa [#allocation12], 0
    %15 = vsyncpa [#allocation4], 0
    // Predicated region
    $region2: #{tpu_custom_call.1} parent=1 // pred_check
      _
    $region3: #{tpu_custom_call.1} parent=1 // pred_check_branch
      %17 = sbr.rel (0) target = $region5
    $region4: #{tpu_custom_call.1} parent=1 // pred_region
      %s19 = ssub.s32 3072, 3072
      %20 = vsyncadd [#allocation3], %s19
      %s21 = sshll.u32 [#allocation2], 4
      %s22 = int_to_ptr.vmem [resolvable:$true] %s21
      %27 = dma.hbm_to_vmem [thread:$0]  %s0, 3072, %s22, [#allocation3], 256, 256, 16
    $region5: #{tpu_custom_call.1} parent=1 // pred_fallthru
      _
    // Predicated region
    $region6: #{tpu_custom_call.1} parent=1 // pred_check
      _
    $region7: #{tpu_custom_call.1} parent=1 // pred_check_branch
      %29 = sbr.rel (0) target = $region9
    $region8: #{tpu_custom_call.1} parent=1 // pred_region
      %s30 = smul.u32 0, 2
      %s31 = sadd.s32 %s30, 2
      %s33 = ssub.s32 1536, 1536
      %34 = vsyncadd [#allocation6], %s33
      %s35 = smul.addr %s31, 12
      %s36 = smul.addr %s35, 128
      %s37 = scalar_lea.hbm %s1, %s36
      %s38 = sshll.u32 [#allocation5], 4
      %s39 = int_to_ptr.vmem [resolvable:$true] %s38
      %44 = dma.hbm_to_vmem [thread:$0]  %s37, 1536, %s39, [#allocation6], 256, 256, 16
    $region9: #{tpu_custom_call.1} parent=1 // pred_fallthru
      _
    // Predicated region
    $region10: #{tpu_custom_call.1} parent=1 // pred_check
      _
    $region11: #{tpu_custom_call.1} parent=1 // pred_check_branch
      %46 = sbr.rel (0) target = $region13
    $region12: #{tpu_custom_call.1} parent=1 // pred_region
      %s48 = ssub.s32 4096, 4096
      %49 = vsyncadd [#allocation6], %s48
      %s50 = sshll.u32 [#allocation7], 4
      %s51 = int_to_ptr.vmem [resolvable:$true] %s50
      %56 = dma.hbm_to_vmem [thread:$0]  %s2, 4096, %s51, [#allocation6], 256, 256, 16
    $region13: #{tpu_custom_call.1} parent=1 // pred_fallthru
      _
    // Predicated region
    $region14: #{tpu_custom_call.1} parent=1 // pred_check
      _
    $region15: #{tpu_custom_call.1} parent=1 // pred_check_branch
      %58 = sbr.rel (0) target = $region17
    $region16: #{tpu_custom_call.1} parent=1 // pred_region
      %s59 = smul.u32 0, 2
      %s60 = sadd.s32 %s59, 2
      %s62 = ssub.s32 2048, 2048
      %63 = vsyncadd [#allocation9], %s62
      %s64 = smul.addr %s60, 16
      %s65 = smul.addr %s64, 128
      %s66 = scalar_lea.hbm %s3, %s65
      %s67 = sshll.u32 [#allocation8], 4
      %s68 = int_to_ptr.vmem [resolvable:$true] %s67
      %73 = dma.hbm_to_vmem [thread:$0]  %s66, 2048, %s68, [#allocation9], 256, 256, 16
    $region17: #{tpu_custom_call.1} parent=1 // pred_fallthru
      _
    // Predicated region
    $region18: #{tpu_custom_call.1} parent=1 // pred_check
      _
    $region19: #{tpu_custom_call.1} parent=1 // pred_check_branch
      %75 = sbr.rel (0) target = $region21
    $region20: #{tpu_custom_call.1} parent=1 // pred_region
      %s77 = ssub.s32 4096, 4096
      %78 = vsyncadd [#allocation9], %s77
      %s79 = sshll.u32 [#allocation10], 4
      %s80 = int_to_ptr.vmem [resolvable:$true] %s79
      %85 = dma.hbm_to_vmem [thread:$0]  %s4, 4096, %s80, [#allocation9], 256, 256, 16
    $region21: #{tpu_custom_call.1} parent=1 // pred_fallthru
      _
    // Predicated region
    $region22: #{tpu_custom_call.1} parent=1 // pred_check
      _
    $region23: #{tpu_custom_call.1} parent=1 // pred_check_branch
      %87 = sbr.rel (0) target = $region25
    $region24: #{tpu_custom_call.1} parent=1 // pred_region
      %s89 = ssub.s32 4096, 4096
      %90 = vsyncadd [#allocation12], %s89
      %s91 = sshll.u32 [#allocation11], 4
      %s92 = int_to_ptr.vmem [resolvable:$true] %s91
      %97 = dma.hbm_to_vmem [thread:$0]  %s5, 4096, %s92, [#allocation12], 256, 256, 16
    $region25: #{tpu_custom_call.1} parent=1 // pred_fallthru
      _
    // Predicated region
    $region26: #{tpu_custom_call.1} parent=1 // pred_check
      _
    $region27: #{tpu_custom_call.1} parent=1 // pred_check_branch
      %99 = sbr.rel (0) target = $region29
    $region28: #{tpu_custom_call.1} parent=1 // pred_region
      %100 = dma.done [#allocation3], 3072
    $region29: #{tpu_custom_call.1} parent=1 // pred_fallthru
      _
    // Predicated region
    $region30: #{tpu_custom_call.1} parent=1 // pred_check
      _
    $region31: #{tpu_custom_call.1} parent=1 // pred_check_branch
      %102 = sbr.rel (0) target = $region33
    $region32: #{tpu_custom_call.1} parent=1 // pred_region
      %103 = dma.done [#allocation6], 1536
    $region33: #{tpu_custom_call.1} parent=1 // pred_fallthru
      _
    // Predicated region
    $region34: #{tpu_custom_call.1} parent=1 // pred_check
      _
    $region35: #{tpu_custom_call.1} parent=1 // pred_check_branch
      %105 = sbr.rel (0) target = $region37
    $region36: #{tpu_custom_call.1} parent=1 // pred_region
      %106 = dma.done [#allocation6], 4096
    $region37: #{tpu_custom_call.1} parent=1 // pred_fallthru
      _
    // Predicated region
    $region38: #{tpu_custom_call.1} parent=1 // pred_check
      _
    $region39: #{tpu_custom_call.1} parent=1 // pred_check_branch
      %108 = sbr.rel (0) target = $region41
    $region40: #{tpu_custom_call.1} parent=1 // pred_region
      %109 = dma.done [#allocation9], 2048
    $region41: #{tpu_custom_call.1} parent=1 // pred_fallthru
      _
    // Predicated region
    $region42: #{tpu_custom_call.1} parent=1 // pred_check
      _
    $region43: #{tpu_custom_call.1} parent=1 // pred_check_branch
      %111 = sbr.rel (0) target = $region45
    $region44: #{tpu_custom_call.1} parent=1 // pred_region
      %112 = dma.done [#allocation9], 4096
    $region45: #{tpu_custom_call.1} parent=1 // pred_fallthru
      _
    // Predicated region
    $region46: #{tpu_custom_call.1} parent=1 // pred_check
      _
    $region47: #{tpu_custom_call.1} parent=1 // pred_check_branch
      %114 = sbr.rel (0) target = $region49
    $region48: #{tpu_custom_call.1} parent=1 // pred_region
      %115 = dma.done [#allocation12], 4096
    $region49: #{tpu_custom_call.1} parent=1 // pred_fallthru
      _
    %s116 = smul.u32 0, 2
    %s117 = sadd.s32 %s116, 2
    %s118 = smul.u32 0, 2
    %s119 = sadd.s32 %s118, 2
    %v120 = vld [vmem:[#allocation11] sm:$0xff]
    %v121 = vld [vmem:[#allocation11 + $0x8] sm:$0xff]
    %v122 = vld [vmem:[#allocation11 + $0x10] sm:$0xff]
    %v123 = vld [vmem:[#allocation11 + $0x18] sm:$0xff]
    %v124 = vld [vmem:[#allocation11 + $0x20] sm:$0xff]
    %v125 = vld [vmem:[#allocation11 + $0x28] sm:$0xff]
    %v126 = vld [vmem:[#allocation11 + $0x30] sm:$0xff]
    %v127 = vld [vmem:[#allocation11 + $0x38] sm:$0xff]
    %v128 = vld [vmem:[#allocation11 + $0x40] sm:$0xff]
    %v129 = vld [vmem:[#allocation11 + $0x48] sm:$0xff]
    %v130 = vld [vmem:[#allocation11 + $0x50] sm:$0xff]
    %v131 = vld [vmem:[#allocation11 + $0x58] sm:$0xff]
    %v132 = vld [vmem:[#allocation11 + $0x60] sm:$0xff]
    %v133 = vld [vmem:[#allocation11 + $0x68] sm:$0xff]
    %v134 = vld [vmem:[#allocation11 + $0x70] sm:$0xff]
    %v135 = vld [vmem:[#allocation11 + $0x78] sm:$0xff]
    %v136 = vld [vmem:[#allocation7] sm:$0xff]
    %v137 = vld [vmem:[#allocation7 + $0x8] sm:$0xff]
    %v138 = vld [vmem:[#allocation7 + $0x10] sm:$0xff]
    %v139 = vld [vmem:[#allocation7 + $0x18] sm:$0xff]
    %v140 = vld [vmem:[#allocation7 + $0x20] sm:$0xff]
    %v141 = vld [vmem:[#allocation7 + $0x28] sm:$0xff]
    %v142 = vld [vmem:[#allocation7 + $0x30] sm:$0xff]
    %v143 = vld [vmem:[#allocation7 + $0x38] sm:$0xff]
    %v144 = vld [vmem:[#allocation7 + $0x40] sm:$0xff]
    %v145 = vld [vmem:[#allocation7 + $0x48] sm:$0xff]
    %v146 = vld [vmem:[#allocation7 + $0x50] sm:$0xff]
    %v147 = vld [vmem:[#allocation7 + $0x58] sm:$0xff]
    %v148 = vld [vmem:[#allocation7 + $0x60] sm:$0xff]
    %v149 = vld [vmem:[#allocation7 + $0x68] sm:$0xff]
    %v150 = vld [vmem:[#allocation7 + $0x70] sm:$0xff]
    %v151 = vld [vmem:[#allocation7 + $0x78] sm:$0xff]
    %v152 = vsub.f32 %v120, %v136
    %v153 = vsub.f32 %v121, %v137
    %v154 = vsub.f32 %v122, %v138
    %v155 = vsub.f32 %v123, %v139
    %v156 = vsub.f32 %v124, %v140
    %v157 = vsub.f32 %v125, %v141
    %v158 = vsub.f32 %v126, %v142
    %v159 = vsub.f32 %v127, %v143
    %v160 = vsub.f32 %v128, %v144
    %v161 = vsub.f32 %v129, %v145
    %v162 = vsub.f32 %v130, %v146
    %v163 = vsub.f32 %v131, %v147
    %v164 = vsub.f32 %v132, %v148
    %v165 = vsub.f32 %v133, %v149
    %v166 = vsub.f32 %v134, %v150
    %v167 = vsub.f32 %v135, %v151
    %v168 = vmul.f32 %v152, %v152
    %v169 = vmul.f32 %v153, %v153
    %v170 = vmul.f32 %v154, %v154
    %v171 = vmul.f32 %v155, %v155
    %v172 = vmul.f32 %v156, %v156
    %v173 = vmul.f32 %v157, %v157
    %v174 = vmul.f32 %v158, %v158
    %v175 = vmul.f32 %v159, %v159
    %v176 = vmul.f32 %v160, %v160
    %v177 = vmul.f32 %v161, %v161
    %v178 = vmul.f32 %v162, %v162
    %v179 = vmul.f32 %v163, %v163
    %v180 = vmul.f32 %v164, %v164
    %v181 = vmul.f32 %v165, %v165
    %v182 = vmul.f32 %v166, %v166
    %v183 = vmul.f32 %v167, %v167
    %v184 = vadd.f32 %v168, %v169
    %v185 = vadd.f32 %v184, %v170
    %v186 = vadd.f32 %v185, %v171
    %v187 = vadd.f32 %v186, %v172
    %v188 = vadd.f32 %v187, %v173
    %v189 = vadd.f32 %v188, %v174
    %v190 = vadd.f32 %v189, %v175
    %v191 = vadd.f32 %v190, %v176
    %v192 = vadd.f32 %v191, %v177
    %v193 = vadd.f32 %v192, %v178
    %v194 = vadd.f32 %v193, %v179
    %v195 = vadd.f32 %v194, %v180
    %v196 = vadd.f32 %v195, %v181
    %v197 = vadd.f32 %v196, %v182
    %v198 = vadd.f32 %v197, %v183
    %199 = vadd.xlane.f32.xlu0 %v198
    %v200 = vpop.xlane.xlu0 %199
    %v201 = vrot.slane %v200, 4
    %v202 = vadd.f32 %v200, %v201
    %v203 = vrot.slane %v202, 2
    %v204 = vadd.f32 %v202, %v203
    %v205 = vrot.slane %v204, 1
    %v206 = vadd.f32 %v204, %v205
    %s207 = vtos %v206
    %s208 = sadd.f32 %s207, 0.0
    %v209 = vld [vmem:[#allocation2] sm:$0xff]
    %v210 = vld [vmem:[#allocation2 + $0x20] sm:$0xff]
    %v211 = vld [vmem:[#allocation2 + $0x40] sm:$0xff]
    %v212 = vld [vmem:[#allocation10] sm:$0xff]
    %v213 = vld [vmem:[#allocation10 + $0x20] sm:$0xff]
    %v214 = vld [vmem:[#allocation10 + $0x40] sm:$0xff]
    %v215 = vld [vmem:[#allocation10 + $0x60] sm:$0xff]
    %s216 = scalar_lea.vmem [#allocation2], 96
    %v217 = vld [vmem:[%s216] sm:$0xff]
    %v218 = vld [vmem:[%s216 + $0x20] sm:$0xff]
    %v219 = vld [vmem:[%s216 + $0x40] sm:$0xff]
    %s220 = scalar_lea.vmem [#allocation7], 128
    %v221 = vld [vmem:[%s220] sm:$0xff]
    %v222 = vld [vmem:[%s220 + $0x20] sm:$0xff]
    %v223 = vld [vmem:[%s220 + $0x40] sm:$0xff]
    %v224 = vld [vmem:[%s220 + $0x60] sm:$0xff]
    %v225 = vsub.f32 %v209, %v217
    %v226 = vsub.f32 %v210, %v218
    %v227 = vsub.f32 %v211, %v219
    %v228 = vmul.f32 %v225, %v225
    %v229 = vmul.f32 %v226, %v226
    %v230 = vmul.f32 %v227, %v227
    %v231 = vadd.f32 %v228, %v229
    %v232 = vadd.f32 %v231, %v230
    %233 = vadd.xlane.f32.xlu0 %v232
    %v234 = vpop.xlane.xlu0 %233
    %v235 = vrot.slane %v234, 4
    %v236 = vadd.f32 %v234, %v235
    %v237 = vrot.slane %v236, 2
    %v238 = vadd.f32 %v236, %v237
    %v239 = vrot.slane %v238, 1
    %v240 = vadd.f32 %v238, %v239
    %s241 = vtos %v240
    %v242 = vsub.f32 %v212, %v221
    %v243 = vsub.f32 %v213, %v222
    %v244 = vsub.f32 %v214, %v223
    %v245 = vsub.f32 %v215, %v224
    %v246 = vmul.f32 %v242, %v242
    %v247 = vmul.f32 %v243, %v243
    %v248 = vmul.f32 %v244, %v244
    %v249 = vmul.f32 %v245, %v245
    %v250 = vadd.f32 %v246, %v247
    %v251 = vadd.f32 %v250, %v248
    %v252 = vadd.f32 %v251, %v249
    %253 = vadd.xlane.f32.xlu0 %v252
    %v254 = vpop.xlane.xlu0 %253
    %v255 = vrot.slane %v254, 4
    %v256 = vadd.f32 %v254, %v255
    %v257 = vrot.slane %v256, 2
    %v258 = vadd.f32 %v256, %v257
    %v259 = vrot.slane %v258, 1
    %v260 = vadd.f32 %v258, %v259
    %s261 = vtos %v260
    %s262 = smul.f32 %s241, -0.00016276042
    %v263 = vstv %s262
    %v264 = vmul.f32 %v263, 1.442695
    %v265 = vpow.pop %v264
    %s266 = vtos %v265
    %s267 = smul.f32 %s261, 0.00012207031
    %s268 = smul.f32 %s266, %s267
    %s269 = sadd.f32 %s268, 0.0
    %v270 = vld [vmem:[#allocation2 + $0x8] sm:$0xff]
    %v271 = vld [vmem:[#allocation2 + $0x28] sm:$0xff]
    %v272 = vld [vmem:[#allocation2 + $0x48] sm:$0xff]
    %v273 = vld [vmem:[#allocation10 + $0x8] sm:$0xff]
    %v274 = vld [vmem:[#allocation10 + $0x28] sm:$0xff]
    %v275 = vld [vmem:[#allocation10 + $0x48] sm:$0xff]
    %v276 = vld [vmem:[#allocation10 + $0x68] sm:$0xff]
    %v277 = vld [vmem:[%s216 + $0x8] sm:$0xff]
    %v278 = vld [vmem:[%s216 + $0x28] sm:$0xff]
    %v279 = vld [vmem:[%s216 + $0x48] sm:$0xff]
    %v280 = vld [vmem:[%s220 + $0x8] sm:$0xff]
    %v281 = vld [vmem:[%s220 + $0x28] sm:$0xff]
    %v282 = vld [vmem:[%s220 + $0x48] sm:$0xff]
    %v283 = vld [vmem:[%s220 + $0x68] sm:$0xff]
    %v284 = vsub.f32 %v270, %v277
    %v285 = vsub.f32 %v271, %v278
    %v286 = vsub.f32 %v272, %v279
    %v287 = vmul.f32 %v284, %v284
    %v288 = vmul.f32 %v285, %v285
    %v289 = vmul.f32 %v286, %v286
    %v290 = vadd.f32 %v287, %v288
    %v291 = vadd.f32 %v290, %v289
    %292 = vadd.xlane.f32.xlu0 %v291
    %v293 = vpop.xlane.xlu0 %292
    %v294 = vrot.slane %v293, 4
    %v295 = vadd.f32 %v293, %v294
    %v296 = vrot.slane %v295, 2
    %v297 = vadd.f32 %v295, %v296
    %v298 = vrot.slane %v297, 1
    %v299 = vadd.f32 %v297, %v298
    %s300 = vtos %v299
    %v301 = vsub.f32 %v273, %v280
    %v302 = vsub.f32 %v274, %v281
    %v303 = vsub.f32 %v275, %v282
    %v304 = vsub.f32 %v276, %v283
    %v305 = vmul.f32 %v301, %v301
    %v306 = vmul.f32 %v302, %v302
    %v307 = vmul.f32 %v303, %v303
    %v308 = vmul.f32 %v304, %v304
    %v309 = vadd.f32 %v305, %v306
    %v310 = vadd.f32 %v309, %v307
    %v311 = vadd.f32 %v310, %v308
    %312 = vadd.xlane.f32.xlu0 %v311
    %v313 = vpop.xlane.xlu0 %312
    %v314 = vrot.slane %v313, 4
    %v315 = vadd.f32 %v313, %v314
    %v316 = vrot.slane %v315, 2
    %v317 = vadd.f32 %v315, %v316
    %v318 = vrot.slane %v317, 1
    %v319 = vadd.f32 %v317, %v318
    %s320 = vtos %v319
    %s321 = smul.f32 %s300, -0.00016276042
    %v322 = vstv %s321
    %v323 = vmul.f32 %v322, 1.442695
    %v324 = vpow.pop %v323
    %s325 = vtos %v324
    %s326 = smul.f32 %s320, 0.00012207031
    %s327 = smul.f32 %s325, %s326
    %s328 = sadd.f32 %s269, %s327
    %v329 = vld [vmem:[#allocation2 + $0x10] sm:$0xff]
    %v330 = vld [vmem:[#allocation2 + $0x30] sm:$0xff]
    %v331 = vld [vmem:[#allocation2 + $0x50] sm:$0xff]
    %v332 = vld [vmem:[#allocation10 + $0x10] sm:$0xff]
    %v333 = vld [vmem:[#allocation10 + $0x30] sm:$0xff]
    %v334 = vld [vmem:[#allocation10 + $0x50] sm:$0xff]
    %v335 = vld [vmem:[#allocation10 + $0x70] sm:$0xff]
    %v336 = vld [vmem:[%s216 + $0x10] sm:$0xff]
    %v337 = vld [vmem:[%s216 + $0x30] sm:$0xff]
    %v338 = vld [vmem:[%s216 + $0x50] sm:$0xff]
    %v339 = vld [vmem:[%s220 + $0x10] sm:$0xff]
    %v340 = vld [vmem:[%s220 + $0x30] sm:$0xff]
    %v341 = vld [vmem:[%s220 + $0x50] sm:$0xff]
    %v342 = vld [vmem:[%s220 + $0x70] sm:$0xff]
    %v343 = vsub.f32 %v329, %v336
    %v344 = vsub.f32 %v330, %v337
    %v345 = vsub.f32 %v331, %v338
    %v346 = vmul.f32 %v343, %v343
    %v347 = vmul.f32 %v344, %v344
    %v348 = vmul.f32 %v345, %v345
    %v349 = vadd.f32 %v346, %v347
    %v350 = vadd.f32 %v349, %v348
    %351 = vadd.xlane.f32.xlu0 %v350
    %v352 = vpop.xlane.xlu0 %351
    %v353 = vrot.slane %v352, 4
    %v354 = vadd.f32 %v352, %v353
    %v355 = vrot.slane %v354, 2
    %v356 = vadd.f32 %v354, %v355
    %v357 = vrot.slane %v356, 1
    %v358 = vadd.f32 %v356, %v357
    %s359 = vtos %v358
    %v360 = vsub.f32 %v332, %v339
    %v361 = vsub.f32 %v333, %v340
    %v362 = vsub.f32 %v334, %v341
    %v363 = vsub.f32 %v335, %v342
    %v364 = vmul.f32 %v360, %v360
    %v365 = vmul.f32 %v361, %v361
    %v366 = vmul.f32 %v362, %v362
    %v367 = vmul.f32 %v363, %v363
    %v368 = vadd.f32 %v364, %v365
    %v369 = vadd.f32 %v368, %v366
    %v370 = vadd.f32 %v369, %v367
    %371 = vadd.xlane.f32.xlu0 %v370
    %v372 = vpop.xlane.xlu0 %371
    %v373 = vrot.slane %v372, 4
    %v374 = vadd.f32 %v372, %v373
    %v375 = vrot.slane %v374, 2
    %v376 = vadd.f32 %v374, %v375
    %v377 = vrot.slane %v376, 1
    %v378 = vadd.f32 %v376, %v377
    %s379 = vtos %v378
    %s380 = smul.f32 %s359, -0.00016276042
    %v381 = vstv %s380
    %v382 = vmul.f32 %v381, 1.442695
    %v383 = vpow.pop %v382
    %s384 = vtos %v383
    %s385 = smul.f32 %s379, 0.00012207031
    %s386 = smul.f32 %s384, %s385
    %s387 = sadd.f32 %s328, %s386
    %v388 = vld [vmem:[#allocation2 + $0x18] sm:$0xff]
    %v389 = vld [vmem:[#allocation2 + $0x38] sm:$0xff]
    %v390 = vld [vmem:[#allocation2 + $0x58] sm:$0xff]
    %v391 = vld [vmem:[#allocation10 + $0x18] sm:$0xff]
    %v392 = vld [vmem:[#allocation10 + $0x38] sm:$0xff]
    %v393 = vld [vmem:[#allocation10 + $0x58] sm:$0xff]
    %v394 = vld [vmem:[#allocation10 + $0x78] sm:$0xff]
    %v395 = vld [vmem:[%s216 + $0x18] sm:$0xff]
    %v396 = vld [vmem:[%s216 + $0x38] sm:$0xff]
    %v397 = vld [vmem:[%s216 + $0x58] sm:$0xff]
    %v398 = vld [vmem:[%s220 + $0x18] sm:$0xff]
    %v399 = vld [vmem:[%s220 + $0x38] sm:$0xff]
    %v400 = vld [vmem:[%s220 + $0x58] sm:$0xff]
    %v401 = vld [vmem:[%s220 + $0x78] sm:$0xff]
    %v402 = vsub.f32 %v388, %v395
    %v403 = vsub.f32 %v389, %v396
    %v404 = vsub.f32 %v390, %v397
    %v405 = vmul.f32 %v402, %v402
    %v406 = vmul.f32 %v403, %v403
    %v407 = vmul.f32 %v404, %v404
    %v408 = vadd.f32 %v405, %v406
    %v409 = vadd.f32 %v408, %v407
    %410 = vadd.xlane.f32.xlu0 %v409
    %v411 = vpop.xlane.xlu0 %410
    %v412 = vrot.slane %v411, 4
    %v413 = vadd.f32 %v411, %v412
    %v414 = vrot.slane %v413, 2
    %v415 = vadd.f32 %v413, %v414
    %v416 = vrot.slane %v415, 1
    %v417 = vadd.f32 %v415, %v416
    %s418 = vtos %v417
    %v419 = vsub.f32 %v391, %v398
    %v420 = vsub.f32 %v392, %v399
    %v421 = vsub.f32 %v393, %v400
    %v422 = vsub.f32 %v394, %v401
    %v423 = vmul.f32 %v419, %v419
    %v424 = vmul.f32 %v420, %v420
    %v425 = vmul.f32 %v421, %v421
    %v426 = vmul.f32 %v422, %v422
    %v427 = vadd.f32 %v423, %v424
    %v428 = vadd.f32 %v427, %v425
    %v429 = vadd.f32 %v428, %v426
    %430 = vadd.xlane.f32.xlu0 %v429
    %v431 = vpop.xlane.xlu0 %430
    %v432 = vrot.slane %v431, 4
    %v433 = vadd.f32 %v431, %v432
    %v434 = vrot.slane %v433, 2
    %v435 = vadd.f32 %v433, %v434
    %v436 = vrot.slane %v435, 1
    %v437 = vadd.f32 %v435, %v436
    %s438 = vtos %v437
    %s439 = smul.f32 %s418, -0.00016276042
    %v440 = vstv %s439
    %v441 = vmul.f32 %v440, 1.442695
    %v442 = vpow.pop %v441
    %s443 = vtos %v442
    %s444 = smul.f32 %s438, 0.00012207031
    %s445 = smul.f32 %s443, %s444
    %s446 = sadd.f32 %s387, %s445
    %s447 = scalar_lea.vmem [#allocation11], 128
    %v448 = vld [vmem:[%s447] sm:$0xff]
    %v449 = vld [vmem:[%s447 + $0x8] sm:$0xff]
    %v450 = vld [vmem:[%s447 + $0x10] sm:$0xff]
    %v451 = vld [vmem:[%s447 + $0x18] sm:$0xff]
    %v452 = vld [vmem:[%s447 + $0x20] sm:$0xff]
    %v453 = vld [vmem:[%s447 + $0x28] sm:$0xff]
    %v454 = vld [vmem:[%s447 + $0x30] sm:$0xff]
    %v455 = vld [vmem:[%s447 + $0x38] sm:$0xff]
    %v456 = vld [vmem:[%s447 + $0x40] sm:$0xff]
    %v457 = vld [vmem:[%s447 + $0x48] sm:$0xff]
    %v458 = vld [vmem:[%s447 + $0x50] sm:$0xff]
    %v459 = vld [vmem:[%s447 + $0x58] sm:$0xff]
    %v460 = vld [vmem:[%s447 + $0x60] sm:$0xff]
    %v461 = vld [vmem:[%s447 + $0x68] sm:$0xff]
    %v462 = vld [vmem:[%s447 + $0x70] sm:$0xff]
    %v463 = vld [vmem:[%s447 + $0x78] sm:$0xff]
    %v464 = vsub.f32 %v448, %v221
    %v465 = vsub.f32 %v449, %v280
    %v466 = vsub.f32 %v450, %v339
    %v467 = vsub.f32 %v451, %v398
    %v468 = vsub.f32 %v452, %v222
    %v469 = vsub.f32 %v453, %v281
    %v470 = vsub.f32 %v454, %v340
    %v471 = vsub.f32 %v455, %v399
    %v472 = vsub.f32 %v456, %v223
    %v473 = vsub.f32 %v457, %v282
    %v474 = vsub.f32 %v458, %v341
    %v475 = vsub.f32 %v459, %v400
    %v476 = vsub.f32 %v460, %v224
    %v477 = vsub.f32 %v461, %v283
    %v478 = vsub.f32 %v462, %v342
    %v479 = vsub.f32 %v463, %v401
    %v480 = vmul.f32 %v464, %v464
    %v481 = vmul.f32 %v465, %v465
    %v482 = vmul.f32 %v466, %v466
    %v483 = vmul.f32 %v467, %v467
    %v484 = vmul.f32 %v468, %v468
    %v485 = vmul.f32 %v469, %v469
    %v486 = vmul.f32 %v470, %v470
    %v487 = vmul.f32 %v471, %v471
    %v488 = vmul.f32 %v472, %v472
    %v489 = vmul.f32 %v473, %v473
    %v490 = vmul.f32 %v474, %v474
    %v491 = vmul.f32 %v475, %v475
    %v492 = vmul.f32 %v476, %v476
    %v493 = vmul.f32 %v477, %v477
    %v494 = vmul.f32 %v478, %v478
    %v495 = vmul.f32 %v479, %v479
    %v496 = vadd.f32 %v480, %v481
    %v497 = vadd.f32 %v496, %v482
    %v498 = vadd.f32 %v497, %v483
    %v499 = vadd.f32 %v498, %v484
    %v500 = vadd.f32 %v499, %v485
    %v501 = vadd.f32 %v500, %v486
    %v502 = vadd.f32 %v501, %v487
    %v503 = vadd.f32 %v502, %v488
    %v504 = vadd.f32 %v503, %v489
    %v505 = vadd.f32 %v504, %v490
    %v506 = vadd.f32 %v505, %v491
    %v507 = vadd.f32 %v506, %v492
    %v508 = vadd.f32 %v507, %v493
    %v509 = vadd.f32 %v508, %v494
    %v510 = vadd.f32 %v509, %v495
    %511 = vadd.xlane.f32.xlu0 %v510
    %v512 = vpop.xlane.xlu0 %511
    %v513 = vrot.slane %v512, 4
    %v514 = vadd.f32 %v512, %v513
    %v515 = vrot.slane %v514, 2
    %v516 = vadd.f32 %v514, %v515
    %v517 = vrot.slane %v516, 1
    %v518 = vadd.f32 %v516, %v517
    %s519 = vtos %v518
    %s520 = sadd.f32 %s208, %s519
    %s521 = scalar_lea.vmem [#allocation10], 128
    %v522 = vld [vmem:[%s521] sm:$0xff]
    %v523 = vld [vmem:[%s521 + $0x20] sm:$0xff]
    %v524 = vld [vmem:[%s521 + $0x40] sm:$0xff]
    %v525 = vld [vmem:[%s521 + $0x60] sm:$0xff]
    %v526 = vld [vmem:[#allocation5] sm:$0xff]
    %v527 = vld [vmem:[#allocation5 + $0x20] sm:$0xff]
    %v528 = vld [vmem:[#allocation5 + $0x40] sm:$0xff]
    %v529 = vld [vmem:[#allocation8] sm:$0xff]
    %v530 = vld [vmem:[#allocation8 + $0x20] sm:$0xff]
    %v531 = vld [vmem:[#allocation8 + $0x40] sm:$0xff]
    %v532 = vld [vmem:[#allocation8 + $0x60] sm:$0xff]
    %v533 = vsub.f32 %v217, %v526
    %v534 = vsub.f32 %v218, %v527
    %v535 = vsub.f32 %v219, %v528
    %v536 = vmul.f32 %v533, %v533
    %v537 = vmul.f32 %v534, %v534
    %v538 = vmul.f32 %v535, %v535
    %v539 = vadd.f32 %v536, %v537
    %v540 = vadd.f32 %v539, %v538
    %541 = vadd.xlane.f32.xlu0 %v540
    %v542 = vpop.xlane.xlu0 %541
    %v543 = vrot.slane %v542, 4
    %v544 = vadd.f32 %v542, %v543
    %v545 = vrot.slane %v544, 2
    %v546 = vadd.f32 %v544, %v545
    %v547 = vrot.slane %v546, 1
    %v548 = vadd.f32 %v546, %v547
    %s549 = vtos %v548
    %v550 = vsub.f32 %v522, %v529
    %v551 = vsub.f32 %v523, %v530
    %v552 = vsub.f32 %v524, %v531
    %v553 = vsub.f32 %v525, %v532
    %v554 = vmul.f32 %v550, %v550
    %v555 = vmul.f32 %v551, %v551
    %v556 = vmul.f32 %v552, %v552
    %v557 = vmul.f32 %v553, %v553
    %v558 = vadd.f32 %v554, %v555
    %v559 = vadd.f32 %v558, %v556
    %v560 = vadd.f32 %v559, %v557
    %561 = vadd.xlane.f32.xlu0 %v560
    %v562 = vpop.xlane.xlu0 %561
    %v563 = vrot.slane %v562, 4
    %v564 = vadd.f32 %v562, %v563
    %v565 = vrot.slane %v564, 2
    %v566 = vadd.f32 %v564, %v565
    %v567 = vrot.slane %v566, 1
    %v568 = vadd.f32 %v566, %v567
    %s569 = vtos %v568
    %s570 = smul.f32 %s549, -0.00016276042
    %v571 = vstv %s570
    %v572 = vmul.f32 %v571, 1.442695
    %v573 = vpow.pop %v572
    %s574 = vtos %v573
    %s575 = smul.f32 %s569, 0.00012207031
    %s576 = smul.f32 %s574, %s575
    %s577 = sadd.f32 %s446, %s576
    %v578 = vld [vmem:[%s521 + $0x8] sm:$0xff]
    %v579 = vld [vmem:[%s521 + $0x28] sm:$0xff]
    %v580 = vld [vmem:[%s521 + $0x48] sm:$0xff]
    %v581 = vld [vmem:[%s521 + $0x68] sm:$0xff]
    %v582 = vld [vmem:[#allocation5 + $0x8] sm:$0xff]
    %v583 = vld [vmem:[#allocation5 + $0x28] sm:$0xff]
    %v584 = vld [vmem:[#allocation5 + $0x48] sm:$0xff]
    %v585 = vld [vmem:[#allocation8 + $0x8] sm:$0xff]
    %v586 = vld [vmem:[#allocation8 + $0x28] sm:$0xff]
    %v587 = vld [vmem:[#allocation8 + $0x48] sm:$0xff]
    %v588 = vld [vmem:[#allocation8 + $0x68] sm:$0xff]
    %v589 = vsub.f32 %v277, %v582
    %v590 = vsub.f32 %v278, %v583
    %v591 = vsub.f32 %v279, %v584
    %v592 = vmul.f32 %v589, %v589
    %v593 = vmul.f32 %v590, %v590
    %v594 = vmul.f32 %v591, %v591
    %v595 = vadd.f32 %v592, %v593
    %v596 = vadd.f32 %v595, %v594
    %597 = vadd.xlane.f32.xlu0 %v596
    %v598 = vpop.xlane.xlu0 %597
    %v599 = vrot.slane %v598, 4
    %v600 = vadd.f32 %v598, %v599
    %v601 = vrot.slane %v600, 2
    %v602 = vadd.f32 %v600, %v601
    %v603 = vrot.slane %v602, 1
    %v604 = vadd.f32 %v602, %v603
    %s605 = vtos %v604
    %v606 = vsub.f32 %v578, %v585
    %v607 = vsub.f32 %v579, %v586
    %v608 = vsub.f32 %v580, %v587
    %v609 = vsub.f32 %v581, %v588
    %v610 = vmul.f32 %v606, %v606
    %v611 = vmul.f32 %v607, %v607
    %v612 = vmul.f32 %v608, %v608
    %v613 = vmul.f32 %v609, %v609
    %v614 = vadd.f32 %v610, %v611
    %v615 = vadd.f32 %v614, %v612
    %v616 = vadd.f32 %v615, %v613
    %617 = vadd.xlane.f32.xlu0 %v616
    %v618 = vpop.xlane.xlu0 %617
    %v619 = vrot.slane %v618, 4
    %v620 = vadd.f32 %v618, %v619
    %v621 = vrot.slane %v620, 2
    %v622 = vadd.f32 %v620, %v621
    %v623 = vrot.slane %v622, 1
    %v624 = vadd.f32 %v622, %v623
    %s625 = vtos %v624
    %s626 = smul.f32 %s605, -0.00016276042
    %v627 = vstv %s626
    %v628 = vmul.f32 %v627, 1.442695
    %v629 = vpow.pop %v628
    %s630 = vtos %v629
    %s631 = smul.f32 %s625, 0.00012207031
    %s632 = smul.f32 %s630, %s631
    %s633 = sadd.f32 %s577, %s632
    %v634 = vld [vmem:[%s521 + $0x10] sm:$0xff]
    %v635 = vld [vmem:[%s521 + $0x30] sm:$0xff]
    %v636 = vld [vmem:[%s521 + $0x50] sm:$0xff]
    %v637 = vld [vmem:[%s521 + $0x70] sm:$0xff]
    %v638 = vld [vmem:[#allocation5 + $0x10] sm:$0xff]
    %v639 = vld [vmem:[#allocation5 + $0x30] sm:$0xff]
    %v640 = vld [vmem:[#allocation5 + $0x50] sm:$0xff]
    %v641 = vld [vmem:[#allocation8 + $0x10] sm:$0xff]
    %v642 = vld [vmem:[#allocation8 + $0x30] sm:$0xff]
    %v643 = vld [vmem:[#allocation8 + $0x50] sm:$0xff]
    %v644 = vld [vmem:[#allocation8 + $0x70] sm:$0xff]
    %v645 = vsub.f32 %v336, %v638
    %v646 = vsub.f32 %v337, %v639
    %v647 = vsub.f32 %v338, %v640
    %v648 = vmul.f32 %v645, %v645
    %v649 = vmul.f32 %v646, %v646
    %v650 = vmul.f32 %v647, %v647
    %v651 = vadd.f32 %v648, %v649
    %v652 = vadd.f32 %v651, %v650
    %653 = vadd.xlane.f32.xlu0 %v652
    %v654 = vpop.xlane.xlu0 %653
    %v655 = vrot.slane %v654, 4
    %v656 = vadd.f32 %v654, %v655
    %v657 = vrot.slane %v656, 2
    %v658 = vadd.f32 %v656, %v657
    %v659 = vrot.slane %v658, 1
    %v660 = vadd.f32 %v658, %v659
    %s661 = vtos %v660
    %v662 = vsub.f32 %v634, %v641
    %v663 = vsub.f32 %v635, %v642
    %v664 = vsub.f32 %v636, %v643
    %v665 = vsub.f32 %v637, %v644
    %v666 = vmul.f32 %v662, %v662
    %v667 = vmul.f32 %v663, %v663
    %v668 = vmul.f32 %v664, %v664
    %v669 = vmul.f32 %v665, %v665
    %v670 = vadd.f32 %v666, %v667
    %v671 = vadd.f32 %v670, %v668
    %v672 = vadd.f32 %v671, %v669
    %673 = vadd.xlane.f32.xlu0 %v672
    %v674 = vpop.xlane.xlu0 %673
    %v675 = vrot.slane %v674, 4
    %v676 = vadd.f32 %v674, %v675
    %v677 = vrot.slane %v676, 2
    %v678 = vadd.f32 %v676, %v677
    %v679 = vrot.slane %v678, 1
    %v680 = vadd.f32 %v678, %v679
    %s681 = vtos %v680
    %s682 = smul.f32 %s661, -0.00016276042
    %v683 = vstv %s682
    %v684 = vmul.f32 %v683, 1.442695
    %v685 = vpow.pop %v684
    %s686 = vtos %v685
    %s687 = smul.f32 %s681, 0.00012207031
    %s688 = smul.f32 %s686, %s687
    %s689 = sadd.f32 %s633, %s688
    %v690 = vld [vmem:[%s521 + $0x18] sm:$0xff]
    %v691 = vld [vmem:[%s521 + $0x38] sm:$0xff]
    %v692 = vld [vmem:[%s521 + $0x58] sm:$0xff]
    %v693 = vld [vmem:[%s521 + $0x78] sm:$0xff]
    %v694 = vld [vmem:[#allocation5 + $0x18] sm:$0xff]
    %v695 = vld [vmem:[#allocation5 + $0x38] sm:$0xff]
    %v696 = vld [vmem:[#allocation5 + $0x58] sm:$0xff]
    %v697 = vld [vmem:[#allocation8 + $0x18] sm:$0xff]
    %v698 = vld [vmem:[#allocation8 + $0x38] sm:$0xff]
    %v699 = vld [vmem:[#allocation8 + $0x58] sm:$0xff]
    %v700 = vld [vmem:[#allocation8 + $0x78] sm:$0xff]
    %v701 = vsub.f32 %v395, %v694
    %v702 = vsub.f32 %v396, %v695
    %v703 = vsub.f32 %v397, %v696
    %v704 = vmul.f32 %v701, %v701
    %v705 = vmul.f32 %v702, %v702
    %v706 = vmul.f32 %v703, %v703
    %v707 = vadd.f32 %v704, %v705
    %v708 = vadd.f32 %v707, %v706
    %709 = vadd.xlane.f32.xlu0 %v708
    %v710 = vpop.xlane.xlu0 %709
    %v711 = vrot.slane %v710, 4
    %v712 = vadd.f32 %v710, %v711
    %v713 = vrot.slane %v712, 2
    %v714 = vadd.f32 %v712, %v713
    %v715 = vrot.slane %v714, 1
    %v716 = vadd.f32 %v714, %v715
    %s717 = vtos %v716
    %v718 = vsub.f32 %v690, %v697
    %v719 = vsub.f32 %v691, %v698
    %v720 = vsub.f32 %v692, %v699
    %v721 = vsub.f32 %v693, %v700
    %v722 = vmul.f32 %v718, %v718
    %v723 = vmul.f32 %v719, %v719
    %v724 = vmul.f32 %v720, %v720
    %v725 = vmul.f32 %v721, %v721
    %v726 = vadd.f32 %v722, %v723
    %v727 = vadd.f32 %v726, %v724
    %v728 = vadd.f32 %v727, %v725
    %729 = vadd.xlane.f32.xlu0 %v728
    %v730 = vpop.xlane.xlu0 %729
    %v731 = vrot.slane %v730, 4
    %v732 = vadd.f32 %v730, %v731
    %v733 = vrot.slane %v732, 2
    %v734 = vadd.f32 %v732, %v733
    %v735 = vrot.slane %v734, 1
    %v736 = vadd.f32 %v734, %v735
    %s737 = vtos %v736
    %s738 = smul.f32 %s717, -0.00016276042
    %v739 = vstv %s738
    %v740 = vmul.f32 %v739, 1.442695
    %v741 = vpow.pop %v740
    %s742 = vtos %v741
    %s743 = smul.f32 %s737, 0.00012207031
    %s744 = smul.f32 %s742, %s743
    %s745 = sadd.f32 %s689, %s744
    %v746 = vstv %s745
    %v747 = vstv %s520
    %vm748 = vcmask 1040384
    %v749 = vsel %vm748, %v746, %v747
    %750 = vst [vmem:[#allocation13] sm:$0x3] %v749
    // Predicated region
    $region50: #{tpu_custom_call.1} parent=1 // pred_check
      _
    $region51: #{tpu_custom_call.1} parent=1 // pred_check_branch
      %752 = sbr.rel (0) target = $region53
    $region52: #{tpu_custom_call.1} parent=1 // pred_region
      %s754 = ssub.s32 32, 32
      %755 = vsyncadd [#allocation4], %s754
      %s757 = sshll.u32 [#allocation13], 4
      %s758 = int_to_ptr.vmem [resolvable:$true] %s757
      %760 = dma.vmem_to_hbm [thread:$0]  %s758, 32, %s6, [#allocation4]
    $region53: #{tpu_custom_call.1} parent=1 // pred_fallthru
      _
    // Predicated region
    $region54: #{tpu_custom_call.1} parent=1 // pred_check
      _
    $region55: #{tpu_custom_call.1} parent=1 // pred_check_branch
      %762 = sbr.rel (0) target = $region57
    $region56: #{tpu_custom_call.1} parent=1 // pred_region
      %763 = dma.done [#allocation4], 32
    $region57: #{tpu_custom_call.1} parent=1 // pred_fallthru
      _
    %764 = vsyncpa [#allocation3], 1
    %765 = vsyncpa [#allocation6], 1
    %766 = vsyncpa [#allocation9], 1
    %767 = vsyncpa [#allocation12], 1
    %768 = vsyncpa [#allocation4], 1

</llo_original>
